<compile_context>
chip_gen: v5e
topology: v5e:2x2
jax: 0.10.0
libtpu: 0.0.40
codegen_flags: <defaults>
</compile_context>

<pallas_src>
import functools

import numpy as np
import jax
import jax.numpy as jnp
from jax.experimental import pallas as pl
from jax.experimental.pallas import tpu as pltpu

# ----- hyperparameters from the PyTorch script -----
EMBEDDING_SIZE = 2
FILTER_SIZES = (2, 2, 2)
NUM_CLASSES = 2
NUM_FILTERS = 3
SEQUENCE_LENGTH = 3
VOCAB_SIZE = 16                      # synthetic vocab
NUM_FILTERS_TOTAL = NUM_FILTERS * len(FILTER_SIZES)

GROUP = 128        # lane-padded width of each per-conv-position column group
C_PAD = 128        # lane-padded classifier output width


def _round_up(x, m):
    return ((x + m - 1) // m) * m


def textcnn_kernel(x_ref, wcomb_ref, bias_ref, fcw_ref, fcb_ref, out_ref,
                   *, seq_len, vocab, group, t_max):
    """Fused embedding + conv(all branches/positions) + ReLU + max-pool + FC.

    x_ref     : [TB, S]                 int32  word indices (batch tile)
    wcomb_ref : [S*V, t_max * GROUP]    bf16   fused embedding+im2col conv slab
    bias_ref  : [1,   t_max * GROUP]    f32    per-(t, branch, filter) bias
    fcw_ref   : [GROUP, C_PAD]          f32    zero-padded classifier weight
    fcb_ref   : [1, C_PAD]              f32    zero-padded classifier bias
    out_ref   : [TB, C_PAD]             f32    lane-dense output tile
    """
    tb = x_ref.shape[0]
    sv = seq_len * vocab

    # One-hot of the word indices laid out as [TB, S*V]: row b has a 1.0 at
    # column s*V + X[b, s] for each position s.  Built with a 2-D iota compare
    # (pure VPU work in f32/int32), then cast once to bf16 (lossless for 0/1)
    # so the MXU runs a single-pass bf16 contraction.
    col = jax.lax.broadcasted_iota(jnp.int32, (tb, sv), 1)
    oh = jnp.where(col == x_ref[:, 0:1], 1.0, 0.0)
    for s in range(1, seq_len):
        oh = oh + jnp.where(col == x_ref[:, s:s + 1] + s * vocab, 1.0, 0.0)
    onehot = oh.astype(wcomb_ref.dtype)

    # Single MXU contraction: embedding gather + every conv branch/position.
    h = jnp.dot(onehot, wcomb_ref[...], preferred_element_type=jnp.float32)
    h = jnp.maximum(h + bias_ref[...], 0.0)          # ReLU, [TB, t_max*GROUP]

    # MaxPool over conv positions.  Each per-t group is 128 lanes wide, so
    # every slice below is a whole-vreg view (no in-vreg lane shuffles).
    # Columns inside a group are ordered [branch, filter] == torch cat() order;
    # padded lanes / invalid-t slots have zero weight+bias -> ReLU gives 0,
    # which never changes the max of nonnegative ReLU outputs and multiplies
    # zero rows of the padded FC weight.
    pooled = h[:, 0:group]
    for t in range(1, t_max):
        pooled = jnp.maximum(pooled, h[:, t * group:(t + 1) * group])

    # Classifier (kept f32 for accuracy; output is lane-dense 128 wide).
    out_ref[...] = (jnp.dot(pooled, fcw_ref[...],
                            preferred_element_type=jnp.float32)
                    + fcb_ref[...])


def build_fused_weights(W_emb, conv_ws, conv_bs, filter_sizes, seq_len,
                        group=GROUP):
    """One-time weight prep (glue): fold the embedding table into an im2col
    conv slab so the kernel's conv is a single matmul from one-hot indices.
    Each per-t column group is padded to `group` (=128) lanes."""
    V, E = W_emb.shape
    F = conv_ws[0].shape[-1]
    nb = len(filter_sizes)
    t_outs = [seq_len - fs + 1 for fs in filter_sizes]
    t_max = max(t_outs)
    n_pool = nb * F
    assert n_pool <= group

    # im2col slab over the flattened embedding: [S*E, t_max*GROUP].
    w_all = np.zeros((seq_len * E, t_max * group), np.float32)
    b_all = np.zeros((1, t_max * group), np.float32)
    for br, fs in enumerate(filter_sizes):
        w_br = np.asarray(conv_ws[br], np.float32)          # [fs, E, F]
        b_br = np.asarray(conv_bs[br], np.float32).reshape(F)
        for t in range(t_outs[br]):
            c0 = t * group + br * F
            for i in range(fs):
                r0 = (t + i) * E
                w_all[r0:r0 + E, c0:c0 + F] = w_br[i]
            b_all[0, c0:c0 + F] = b_br

    # Fold embedding in: onehot[b, s*V+v] @ (blockdiag(W_emb) @ w_all)
    #                 == emb_flat[b] @ w_all.
    g = np.zeros((seq_len * V, seq_len * E), np.float32)
    W_emb_np = np.asarray(W_emb, np.float32)
    for s in range(seq_len):
        g[s * V:(s + 1) * V, s * E:(s + 1) * E] = W_emb_np
    w_comb = g @ w_all                                       # [S*V, t_max*GROUP]

    # bf16 weights: one MXU pass instead of ~3 emulated f32 passes.
    return (jnp.asarray(w_comb, jnp.bfloat16),
            jnp.asarray(b_all, jnp.float32), t_max, n_pool)


def textcnn_forward(X, W_emb, conv_ws, conv_bs, fc_w, fc_b, *, block_b=None):
    B, S = X.shape
    V, E = W_emb.shape
    K, C = fc_w.shape
    assert K <= GROUP and C <= C_PAD

    if block_b is None:
        if B <= 256:
            # One tile covering the whole (tiny) batch: no per-step overhead.
            block_b = _round_up(B, 8)
        else:
            # At least 2 tiles (so the parallel batch axis can shard across
            # v7x's 2 TensorCores), each a multiple of 128, capped at 2048
            # rows (~8 MiB live with the 128-padded layouts -> fits v7x VMEM).
            block_b = min(2048, _round_up(_round_up(B, 256) // 2, 128))

    w_comb, b_all, t_max, n_pool = build_fused_weights(
        W_emb, conv_ws, conv_bs, FILTER_SIZES, S)

    # Zero-pad the classifier to lane-dense K=GROUP, N=C_PAD.
    fcw = np.zeros((GROUP, C_PAD), np.float32)
    fcw[:K, :C] = np.asarray(fc_w, np.float32)
    fcb = np.zeros((1, C_PAD), np.float32)
    fcb[0, :C] = np.asarray(fc_b, np.float32).reshape(-1)
    fc_w_pad = jnp.asarray(fcw)
    fc_b_pad = jnp.asarray(fcb)

    # Pad batch to a multiple of the tile (index 0 is a valid vocab entry).
    B_pad = _round_up(B, block_b)
    X_pad = jnp.zeros((B_pad, S), jnp.int32).at[:B].set(X.astype(jnp.int32))

    kernel = functools.partial(textcnn_kernel, seq_len=S, vocab=V,
                               group=GROUP, t_max=t_max)
    out = pl.pallas_call(
        kernel,
        out_shape=jax.ShapeDtypeStruct((B_pad, C_PAD), jnp.float32),
        grid_spec=pltpu.PrefetchScalarGridSpec(
            num_scalar_prefetch=0,
            grid=(B_pad // block_b,),
            in_specs=[
                pl.BlockSpec((block_b, S), lambda b: (b, 0)),        # indices
                pl.BlockSpec(w_comb.shape, lambda b: (0, 0)),        # conv slab
                pl.BlockSpec(b_all.shape, lambda b: (0, 0)),         # conv bias
                pl.BlockSpec(fc_w_pad.shape, lambda b: (0, 0)),      # fc weight
                pl.BlockSpec(fc_b_pad.shape, lambda b: (0, 0)),      # fc bias
            ],
            out_specs=pl.BlockSpec((block_b, C_PAD), lambda b: (b, 0)),
        ),
        compiler_params=pltpu.CompilerParams(
            dimension_semantics=("parallel",),
            vmem_limit_bytes=48 * 1024 * 1024),
    )(X_pad, w_comb, b_all, fc_w_pad, fc_b_pad)
    return out[:B, :C]


def textcnn_ref(X, W_emb, conv_ws, conv_bs, fc_w, fc_b):
    """Pure-JAX f32 reference mirroring the PyTorch forward semantics."""
    emb = W_emb[X].astype(jnp.float32)                       # [B, S, E]
    pooled = []
    for br, fs in enumerate(FILTER_SIZES):
        t_out = SEQUENCE_LENGTH - fs + 1
        outs = []
        for t in range(t_out):
            pre = jnp.einsum('bie,ief->bf', emb[:, t:t + fs, :], conv_ws[br],
                             precision=jax.lax.Precision.HIGHEST)
            outs.append(jnp.maximum(pre + conv_bs[br].reshape(1, -1), 0.0))
        pooled.append(jnp.max(jnp.stack(outs, axis=1), axis=1))
    h_pool_flat = jnp.concatenate(pooled, axis=-1)           # [B, NB*F]
    return (jnp.dot(h_pool_flat, fc_w, precision=jax.lax.Precision.HIGHEST)
            + fc_b.reshape(1, -1))


if __name__ == "__main__":
    key = jax.random.PRNGKey(0)
    k_emb, k_conv, k_fc, k_x = jax.random.split(key, 4)

    # Parameters (deterministic, matching the module's __init__ shapes).
    W_emb = jax.random.uniform(k_emb, (VOCAB_SIZE, EMBEDDING_SIZE),
                               jnp.float32, -1.0, 1.0)
    # Per-branch conv weights [fs, E, F] (PyTorch Conv2d weight [F,1,fs,E],
    # pre-transposed) and biases [F].
    conv_keys = jax.random.split(k_conv, 2 * len(FILTER_SIZES))
    conv_ws, conv_bs = [], []
    for br, fs in enumerate(FILTER_SIZES):
        conv_ws.append(jax.random.uniform(conv_keys[2 * br],
                                          (fs, EMBEDDING_SIZE, NUM_FILTERS),
                                          jnp.float32, -1.0, 1.0))
        conv_bs.append(jax.random.uniform(conv_keys[2 * br + 1], (NUM_FILTERS,),
                                          jnp.float32, -0.5, 0.5))
    fc_w = jax.random.uniform(k_fc, (NUM_FILTERS_TOTAL, NUM_CLASSES),
                              jnp.float32, -1.0, 1.0)
    fc_b = 0.1 * jnp.ones((NUM_CLASSES,), jnp.float32)

    # Input: batch of 6 "sentences" of length 3 (word indices).
    B = 6
    X = jax.random.randint(k_x, (B, SEQUENCE_LENGTH), 0, VOCAB_SIZE, jnp.int32)

    out = textcnn_forward(X, W_emb, conv_ws, conv_bs, fc_w, fc_b)
    out = jax.block_until_ready(out)

    ref = textcnn_ref(X, W_emb, conv_ws, conv_bs, fc_w, fc_b)
    assert out.shape == (B, NUM_CLASSES), out.shape
    # Tolerance relaxed vs the pure-f32 reference because the fused
    # embedding+conv slab is held in bf16 for the MXU (per perf review).
    assert jnp.allclose(out, ref, atol=5e-2, rtol=5e-2), (out, ref)

    print("KERNEL_OK")
</pallas_src>

<mosaic_0001>
module attributes {stable_mosaic.version = 11 : i64} {
  func.func @textcnn_kernel(%arg0: i32, %arg1: memref<8x3xi32, #tpu.memory_space<vmem>>, %arg2: memref<48x256xbf16, #tpu.memory_space<vmem>>, %arg3: memref<1x256xf32, #tpu.memory_space<vmem>>, %arg4: memref<128x128xf32, #tpu.memory_space<vmem>>, %arg5: memref<1x128xf32, #tpu.memory_space<vmem>>, %arg6: memref<8x128xf32, #tpu.memory_space<vmem>>) attributes {dimension_semantics = [#tpu.dimension_semantics<parallel>], iteration_bounds = array<i64: 1>, scalar_prefetch = 0 : i64, scratch_operands = 0 : i64, tpu.core_type = #tpu.core_type<tc>, window_params = [{transform_indices = @transform_0, window_bounds = array<i64: 8, 3>}, {pipeline_mode = #tpu.pipeline_mode<synchronous>, transform_indices = @transform_1, window_bounds = array<i64: 48, 256>}, {pipeline_mode = #tpu.pipeline_mode<synchronous>, transform_indices = @transform_2, window_bounds = array<i64: 1, 256>}, {pipeline_mode = #tpu.pipeline_mode<synchronous>, transform_indices = @transform_3, window_bounds = array<i64: 128, 128>}, {pipeline_mode = #tpu.pipeline_mode<synchronous>, transform_indices = @transform_4, window_bounds = array<i64: 1, 128>}, {transform_indices = @transform_5, window_bounds = array<i64: 8, 128>}]} {
    %0 = tpu.iota {dimensions = array<i32: 1>} : vector<8x48xi32>
    %c0 = arith.constant 0 : index
    %c0_0 = arith.constant 0 : index
    %1 = vector.load %arg1[%c0, %c0_0] : memref<8x3xi32, #tpu.memory_space<vmem>>, vector<8x1xi32>
    %2 = vector.broadcast %1 : vector<8x1xi32> to vector<8x48xi32>
    %3 = arith.cmpi eq, %0, %2 : vector<8x48xi32>
    %cst = arith.constant 1.000000e+00 : f32
    %cst_1 = arith.constant 0.000000e+00 : f32
    %4 = vector.broadcast %cst : f32 to vector<8x48xf32>
    %5 = vector.broadcast %cst_1 : f32 to vector<8x48xf32>
    %6 = arith.select %3, %4, %5 : vector<8x48xi1>, vector<8x48xf32>
    %c0_2 = arith.constant 0 : index
    %c1 = arith.constant 1 : index
    %7 = vector.load %arg1[%c0_2, %c1] : memref<8x3xi32, #tpu.memory_space<vmem>>, vector<8x1xi32>
    %c16_i32 = arith.constant 16 : i32
    %8 = vector.broadcast %c16_i32 : i32 to vector<8x1xi32>
    %9 = arith.addi %7, %8 : vector<8x1xi32>
    %10 = vector.broadcast %9 : vector<8x1xi32> to vector<8x48xi32>
    %11 = arith.cmpi eq, %0, %10 : vector<8x48xi32>
    %cst_3 = arith.constant 1.000000e+00 : f32
    %cst_4 = arith.constant 0.000000e+00 : f32
    %12 = vector.broadcast %cst_3 : f32 to vector<8x48xf32>
    %13 = vector.broadcast %cst_4 : f32 to vector<8x48xf32>
    %14 = arith.select %11, %12, %13 : vector<8x48xi1>, vector<8x48xf32>
    %15 = arith.addf %6, %14 : vector<8x48xf32>
    %c0_5 = arith.constant 0 : index
    %c2 = arith.constant 2 : index
    %16 = vector.load %arg1[%c0_5, %c2] : memref<8x3xi32, #tpu.memory_space<vmem>>, vector<8x1xi32>
    %c32_i32 = arith.constant 32 : i32
    %17 = vector.broadcast %c32_i32 : i32 to vector<8x1xi32>
    %18 = arith.addi %16, %17 : vector<8x1xi32>
    %19 = vector.broadcast %18 : vector<8x1xi32> to vector<8x48xi32>
    %20 = arith.cmpi eq, %0, %19 : vector<8x48xi32>
    %cst_6 = arith.constant 1.000000e+00 : f32
    %cst_7 = arith.constant 0.000000e+00 : f32
    %21 = vector.broadcast %cst_6 : f32 to vector<8x48xf32>
    %22 = vector.broadcast %cst_7 : f32 to vector<8x48xf32>
    %23 = arith.select %20, %21, %22 : vector<8x48xi1>, vector<8x48xf32>
    %24 = arith.addf %15, %23 : vector<8x48xf32>
    %25 = arith.truncf %24 : vector<8x48xf32> to vector<8x48xbf16>
    %c0_8 = arith.constant 0 : index
    %c0_9 = arith.constant 0 : index
    %26 = vector.load %arg2[%c0_8, %c0_9] : memref<48x256xbf16, #tpu.memory_space<vmem>>, vector<48x256xbf16>
    %cst_10 = arith.constant dense<0.000000e+00> : vector<8x256xf32>
    %27 = tpu.matmul %25, %26, %cst_10 {dimension_numbers = #tpu.dot_dimension_numbers<[1], [0], [0], [1], [0, 0, 1, 1], [], []>} : vector<8x48xbf16>, vector<48x256xbf16>, vector<8x256xf32> -> vector<8x256xf32>
    %c0_11 = arith.constant 0 : index
    %c0_12 = arith.constant 0 : index
    %28 = vector.load %arg3[%c0_11, %c0_12] : memref<1x256xf32, #tpu.memory_space<vmem>>, vector<1x256xf32>
    %29 = vector.broadcast %28 : vector<1x256xf32> to vector<8x256xf32>
    %30 = arith.addf %27, %29 : vector<8x256xf32>
    %cst_13 = arith.constant 0.000000e+00 : f32
    %31 = vector.broadcast %cst_13 : f32 to vector<8x256xf32>
    %32 = arith.maximumf %30, %31 : vector<8x256xf32>
    %33 = vector.extract_strided_slice %32 {offsets = [0, 0], sizes = [8, 128], strides = [1, 1]} : vector<8x256xf32> to vector<8x128xf32>
    %34 = vector.extract_strided_slice %32 {offsets = [0, 128], sizes = [8, 128], strides = [1, 1]} : vector<8x256xf32> to vector<8x128xf32>
    %35 = arith.maximumf %33, %34 : vector<8x128xf32>
    %c0_14 = arith.constant 0 : index
    %c0_15 = arith.constant 0 : index
    %36 = vector.load %arg4[%c0_14, %c0_15] : memref<128x128xf32, #tpu.memory_space<vmem>>, vector<128x128xf32>
    %cst_16 = arith.constant dense<0.000000e+00> : vector<8x128xf32>
    %37 = tpu.matmul %35, %36, %cst_16 {dimension_numbers = #tpu.dot_dimension_numbers<[1], [0], [0], [1], [0, 0, 1, 1], [], []>} : vector<8x128xf32>, vector<128x128xf32>, vector<8x128xf32> -> vector<8x128xf32>
    %c0_17 = arith.constant 0 : index
    %c0_18 = arith.constant 0 : index
    %38 = vector.load %arg5[%c0_17, %c0_18] : memref<1x128xf32, #tpu.memory_space<vmem>>, vector<1x128xf32>
    %39 = vector.broadcast %38 : vector<1x128xf32> to vector<8x128xf32>
    %40 = arith.addf %37, %39 : vector<8x128xf32>
    %c0_19 = arith.constant 0 : index
    %c0_20 = arith.constant 0 : index
    %41 = vector.load %arg6[%c0_19, %c0_20] : memref<8x128xf32, #tpu.memory_space<vmem>>, vector<8x128xf32>
    tpu.vector_store %arg6[%c0_19, %c0_20], %40 {strides = array<i32>} : memref<8x128xf32, #tpu.memory_space<vmem>>, vector<8x128xf32>,
    return
  }
  func.func @transform_0(%arg0: i32) -> (i32, i32) {
    %c0_i32 = arith.constant 0 : i32
    %c0_i32_0 = arith.constant 0 : i32
    return %arg0, %c0_i32 : i32, i32
  }
  func.func @transform_1(%arg0: i32) -> (i32, i32) {
    %c0_i32 = arith.constant 0 : i32
    %c0_i32_0 = arith.constant 0 : i32
    %c0_i32_1 = arith.constant 0 : i32
    return %c0_i32, %c0_i32_0 : i32, i32
  }
  func.func @transform_2(%arg0: i32) -> (i32, i32) {
    %c0_i32 = arith.constant 0 : i32
    %c0_i32_0 = arith.constant 0 : i32
    %c0_i32_1 = arith.constant 0 : i32
    return %c0_i32, %c0_i32_0 : i32, i32
  }
  func.func @transform_3(%arg0: i32) -> (i32, i32) {
    %c0_i32 = arith.constant 0 : i32
    %c0_i32_0 = arith.constant 0 : i32
    %c0_i32_1 = arith.constant 0 : i32
    return %c0_i32, %c0_i32_0 : i32, i32
  }
  func.func @transform_4(%arg0: i32) -> (i32, i32) {
    %c0_i32 = arith.constant 0 : i32
    %c0_i32_0 = arith.constant 0 : i32
    %c0_i32_1 = arith.constant 0 : i32
    return %c0_i32, %c0_i32_0 : i32, i32
  }
  func.func @transform_5(%arg0: i32) -> (i32, i32) {
    %c0_i32 = arith.constant 0 : i32
    %c0_i32_0 = arith.constant 0 : i32
    return %arg0, %c0_i32 : i32, i32
  }
}

</mosaic_0001>

<llo_original>
// kernel: tpu_custom_call.1
$region0: #{tpu_custom_call.1}
  #allocation0 [shape = 'u32[]', space=smem, size = 0x4, offset = 0x4, fixed_abs, tag = 'smem constant byte address 0x4 - core index']
  #allocation1 [shape = 'u32[72,128]{1,0:T(1,128)}', space=vmem, size = 0x9000, scoped, tag = 'internal scratch']
  %s0 = inlined_call_operand.vmem [shape: s32[8,3], index: 0, kind: input, shape index: {}]
  %s1 = inlined_call_operand.hbm [shape: bf16[48,256], index: 1, kind: input, shape index: {}]
  %s2 = inlined_call_operand.vmem [shape: f32[1,256], index: 2, kind: input, shape index: {}]
  %s3 = inlined_call_operand.hbm [shape: f32[128,128], index: 3, kind: input, shape index: {}]
  %s4 = inlined_call_operand.vmem [shape: f32[1,128], index: 4, kind: input, shape index: {}]
  %s5 = inlined_call_operand.hbm [shape: f32[8,128], index: 5, kind: output, shape index: {}]
  %s6 = sld [smem:[#allocation0]]
  $region38: #{tpu_custom_call.1} parent=0
    _
  %s8 = ssub.s32 1, %s6
  %s9 = scalar_select 0, %s8, %s6
  $region1: #{tpu_custom_call.1} parent=0
    #allocation2 [shape = 'u8[24576]{0}', space=vmem, size = 0x6000, scoped, tag = 'input window, operand 1, single buffered']
    #allocation3 [shape = 's32[1]{0}', space=sflag, size = 0x4, scoped, tag = 'scoped memory for tpu_custom_call.1']
    #allocation4 [shape = 's32[1]{0}', space=sflag, size = 0x4, scoped, tag = 'scoped memory for tpu_custom_call.1']
    #allocation5 [shape = 'u8[65536]{0}', space=vmem, size = 0x10000, scoped, tag = 'input window, operand 3, single buffered']
    #allocation6 [shape = 's32[1]{0}', space=sflag, size = 0x4, scoped, tag = 'scoped memory for tpu_custom_call.1']
    #allocation7 [shape = 'u8[4096]{0}', space=vmem, size = 0x1000, scoped, tag = 'output window, operand 0, single buffered']
    %10 = vsyncpa [#allocation3], 0
    %11 = vsyncpa [#allocation6], 0
    %12 = vsyncpa [#allocation4], 0
    // Predicated region
    $region2: #{tpu_custom_call.1} parent=1 // pred_check
      _
    $region3: #{tpu_custom_call.1} parent=1 // pred_check_branch
      %14 = sbr.rel (0) target = $region5
    $region4: #{tpu_custom_call.1} parent=1 // pred_region
      _
    $region5: #{tpu_custom_call.1} parent=1 // pred_fallthru
      _
    // Predicated region
    $region6: #{tpu_custom_call.1} parent=1 // pred_check
      _
    $region7: #{tpu_custom_call.1} parent=1 // pred_check_branch
      %16 = sbr.rel (0) target = $region9
    $region8: #{tpu_custom_call.1} parent=1 // pred_region
      %18 = vsyncadd [#allocation3], 0
      %s19 = sshll.u32 %s1, 4
      %s20 = int_to_ptr.hbm [resolvable:$true] %s19
      %s21 = sshll.u32 [#allocation2], 4
      %s22 = int_to_ptr.vmem [resolvable:$true] %s21
      %27 = dma.hbm_to_vmem [thread:$0]  %s20, 768, %s22, [#allocation3], 128, 128, 8
    $region9: #{tpu_custom_call.1} parent=1 // pred_fallthru
      _
    // Predicated region
    $region10: #{tpu_custom_call.1} parent=1 // pred_check
      _
    $region11: #{tpu_custom_call.1} parent=1 // pred_check_branch
      %29 = sbr.rel (0) target = $region13
    $region12: #{tpu_custom_call.1} parent=1 // pred_region
      _
    $region13: #{tpu_custom_call.1} parent=1 // pred_fallthru
      _
    // Predicated region
    $region14: #{tpu_custom_call.1} parent=1 // pred_check
      _
    $region15: #{tpu_custom_call.1} parent=1 // pred_check_branch
      %31 = sbr.rel (0) target = $region17
    $region16: #{tpu_custom_call.1} parent=1 // pred_region
      %33 = vsyncadd [#allocation6], 0
      %s34 = sshll.u32 %s3, 4
      %s35 = int_to_ptr.hbm [resolvable:$true] %s34
      %s36 = sshll.u32 [#allocation5], 4
      %s37 = int_to_ptr.vmem [resolvable:$true] %s36
      %42 = dma.hbm_to_vmem [thread:$0]  %s35, 2048, %s37, [#allocation6], 128, 128, 8
    $region17: #{tpu_custom_call.1} parent=1 // pred_fallthru
      _
    // Predicated region
    $region18: #{tpu_custom_call.1} parent=1 // pred_check
      _
    $region19: #{tpu_custom_call.1} parent=1 // pred_check_branch
      %44 = sbr.rel (0) target = $region21
    $region20: #{tpu_custom_call.1} parent=1 // pred_region
      _
    $region21: #{tpu_custom_call.1} parent=1 // pred_fallthru
      _
    // Predicated region
    $region22: #{tpu_custom_call.1} parent=1 // pred_check
      _
    $region23: #{tpu_custom_call.1} parent=1 // pred_check_branch
      %46 = sbr.rel (0) target = $region25
    $region24: #{tpu_custom_call.1} parent=1 // pred_region
      %48 = dma.done [#allocation3], 768
    $region25: #{tpu_custom_call.1} parent=1 // pred_fallthru
      _
    // Predicated region
    $region26: #{tpu_custom_call.1} parent=1 // pred_check
      _
    $region27: #{tpu_custom_call.1} parent=1 // pred_check_branch
      %50 = sbr.rel (0) target = $region29
    $region28: #{tpu_custom_call.1} parent=1 // pred_region
      %52 = dma.done [#allocation6], 2048
    $region29: #{tpu_custom_call.1} parent=1 // pred_fallthru
      _
    %v54 = vlaneseq
    %v55 = vand.u32 %v54, 127
    %v56 = vld [vmem:[%s0] sm:$0xff]
    %57 = vset.pattern.permute.xlu0 0
    %58 = vperm.xlu0 %57, %v56
    %v59 = vpop.permute.xlu0 %58
    %vm60 = vcmp.eq.s32.totalorder %v55, %v59
    %v61 = vsel %vm60, 1.0, 0.0
    %v62 = vadd.s32 %v56, 16
    %63 = vset.pattern.permute.xlu0 1
    %64 = vperm.xlu0 %63, %v62
    %v65 = vpop.permute.xlu0 %64
    %vm66 = vcmp.eq.s32.totalorder %v55, %v65
    %v67 = vsel %vm66, 1.0, 0.0
    %v68 = vadd.f32 %v61, %v67
    %v69 = vadd.s32 %v56, 32
    %70 = vset.pattern.permute.xlu0 2
    %71 = vperm.xlu0 %70, %v69
    %v72 = vpop.permute.xlu0 %71
    %vm73 = vcmp.eq.s32.totalorder %v55, %v72
    %v74 = vsel %vm73, 1.0, 0.0
    %v75 = vadd.f32 %v68, %v74
    %v76 = vpack.c.bf16 %v75, %v75
    %v77 = vld [vmem:[#allocation2] sm:$0xff]
    %v78 = vld [vmem:[#allocation2 + $0x8] sm:$0xff]
    %v79 = vld [vmem:[#allocation2 + $0x10] sm:$0xff]
    %v80 = vld [vmem:[#allocation2 + $0x18] sm:$0xff]
    %v81 = vld [vmem:[#allocation2 + $0x20] sm:$0xff]
    %v82 = vld [vmem:[#allocation2 + $0x28] sm:$0xff]
    %v83 = vld [vmem:[%s2] sm:$0x3]
    %v85 = vperm.slane %v83, 0
    %v86 = vperm.slane %v83, 1
    %v95 = vunpack.c.l.b16 %v77
    %v96 = vunpack.c.h.b16 %v77
    %v97 = vunpack.c.l.b16 %v78
    %v98 = vunpack.c.h.b16 %v78
    %v99 = vunpack.c.l.b16 %v79
    %v100 = vunpack.c.h.b16 %v79
    %v101 = vunpack.c.l.b16 %v80
    %v102 = vunpack.c.h.b16 %v80
    %v103 = vunpack.c.l.b16 %v81
    %v104 = vunpack.c.h.b16 %v81
    %v105 = vunpack.c.l.b16 %v82
    %v106 = vunpack.c.h.b16 %v82
    %v107 = vpack.c.b16 %v97, %v95
    %v108 = vpack.c.b16 %v98, %v96
    %v109 = vpack.c.b16 %v101, %v99
    %v110 = vpack.c.b16 %v102, %v100
    %v111 = vpack.c.b16 %v105, %v103
    %v112 = vpack.c.b16 %v106, %v104
    %vm119 = vcmask 392192
    %v121 = vsel %vm119, %v76, 0
    %123 = vmatpush.bf16.msra.mxu0 0
    %124 = vmatpush.bf16.msra.mxu0 0
    %125 = vmatpush.bf16.msra.mxu0 0
    %126 = vmatpush.bf16.msra.mxu0 0
    %127 = vmatpush.bf16.msra.mxu0 0
    %128 = vmatpush.bf16.msra.mxu0 %v111
    %129 = vmatpush.bf16.msra.mxu0 %v109
    %130 = vmatpush.bf16.msra.mxu0 %v107
    %131 = vmatmul.bf16.gmra.mxu0 %v121
    %v132 = vpop.f32.mrf.mxu0
    %v133 = vadd.f32 %v85, %v132
    %v134 = vpop.f32.mrf.mxu0
    %135 = vdwg.mxu0
    %136 = vmatpush.bf16.msra.mxu0 0
    %137 = vmatpush.bf16.msra.mxu0 0
    %138 = vmatpush.bf16.msra.mxu0 0
    %139 = vmatpush.bf16.msra.mxu0 0
    %140 = vmatpush.bf16.msra.mxu0 0
    %141 = vmatpush.bf16.msra.mxu0 %v112
    %142 = vmatpush.bf16.msra.mxu0 %v110
    %143 = vmatpush.bf16.msra.mxu0 %v108
    %144 = vmatmul.bf16.gmra.mxu0 %v121
    %v145 = vpop.f32.mrf.mxu0
    %v146 = vadd.f32 %v86, %v145
    %v147 = vpop.f32.mrf.mxu0
    %148 = vdwg.mxu0
    %v149 = vmax.f32 %v133, 0.0
    %v150 = vmax.f32 %v146, 0.0
    %v151 = vmax.f32 %v149, %v150
    %v152 = vld [vmem:[#allocation5] sm:$0xff]
    %v153 = vld [vmem:[#allocation5 + $0x8] sm:$0xff]
    %v154 = vld [vmem:[#allocation5 + $0x10] sm:$0xff]
    %v155 = vld [vmem:[#allocation5 + $0x18] sm:$0xff]
    %v156 = vld [vmem:[#allocation5 + $0x20] sm:$0xff]
    %v157 = vld [vmem:[#allocation5 + $0x28] sm:$0xff]
    %v158 = vld [vmem:[#allocation5 + $0x30] sm:$0xff]
    %v159 = vld [vmem:[#allocation5 + $0x38] sm:$0xff]
    %v160 = vld [vmem:[#allocation5 + $0x40] sm:$0xff]
    %v161 = vld [vmem:[#allocation5 + $0x48] sm:$0xff]
    %v162 = vld [vmem:[#allocation5 + $0x50] sm:$0xff]
    %v163 = vld [vmem:[#allocation5 + $0x58] sm:$0xff]
    %v164 = vld [vmem:[#allocation5 + $0x60] sm:$0xff]
    %v165 = vld [vmem:[#allocation5 + $0x68] sm:$0xff]
    %v166 = vld [vmem:[#allocation5 + $0x70] sm:$0xff]
    %v167 = vld [vmem:[#allocation5 + $0x78] sm:$0xff]
    %v168 = vld [vmem:[%s4] sm:$0x1]
    %v170 = vperm.slane %v168, 0
    %172 = vmatpush.msra.mxu0 %v167
    %173 = vmatpush.msra.mxu0 %v166
    %174 = vmatpush.msra.mxu0 %v165
    %175 = vmatpush.msra.mxu0 %v164
    %176 = vmatpush.msra.mxu0 %v163
    %177 = vmatpush.msra.mxu0 %v162
    %178 = vmatpush.msra.mxu0 %v161
    %179 = vmatpush.msra.mxu0 %v160
    %180 = vmatpush.msra.mxu0 %v159
    %181 = vmatpush.msra.mxu0 %v158
    %182 = vmatpush.msra.mxu0 %v157
    %183 = vmatpush.msra.mxu0 %v156
    %184 = vmatpush.msra.mxu0 %v155
    %185 = vmatpush.msra.mxu0 %v154
    %186 = vmatpush.msra.mxu0 %v153
    %187 = vmatpush.msra.mxu0 %v152
    %188 = vmatmul.f32.gmra.mxu0 %v151
    %v189 = vpop.f32.mrf.mxu0
    %v190 = vadd.f32 %v170, %v189
    %191 = vdwg.mxu0
    %192 = vst [vmem:[#allocation7] sm:$0xff] %v190
    // Predicated region
    $region30: #{tpu_custom_call.1} parent=1 // pred_check
      _
    $region31: #{tpu_custom_call.1} parent=1 // pred_check_branch
      %194 = sbr.rel (0) target = $region33
    $region32: #{tpu_custom_call.1} parent=1 // pred_region
      %196 = vsyncadd [#allocation4], 0
      %s198 = sshll.u32 [#allocation7], 4
      %s199 = int_to_ptr.vmem [resolvable:$true] %s198
      %s200 = sshll.u32 %s5, 4
      %s201 = int_to_ptr.hbm [resolvable:$true] %s200
      %203 = dma.vmem_to_hbm [thread:$0]  %s199, 128, %s201, [#allocation4]
    $region33: #{tpu_custom_call.1} parent=1 // pred_fallthru
      _
    // Predicated region
    $region34: #{tpu_custom_call.1} parent=1 // pred_check
      _
    $region35: #{tpu_custom_call.1} parent=1 // pred_check_branch
      %205 = sbr.rel (0) target = $region37
    $region36: #{tpu_custom_call.1} parent=1 // pred_region
      %207 = dma.done [#allocation4], 128
    $region37: #{tpu_custom_call.1} parent=1 // pred_fallthru
      _
    %208 = vsyncpa [#allocation3], 1
    %209 = vsyncpa [#allocation6], 1
    %210 = vsyncpa [#allocation4], 1

</llo_original>
